<compile_context>
chip_gen: v6e
topology: v6e:2x2x1
jax: 0.10.0
libtpu: 0.0.40
codegen_flags: <defaults>
</compile_context>

<pallas_src>
import jax
import jax.numpy as jnp
import numpy as np
from jax.experimental import pallas as pl
from jax.experimental.pallas import tpu as pltpu

# ------------------------- configuration --------------------------------- #
MAX_Z = 20          # maximum_atomic_number  (Embedding_Z rows)
F_ATOM = 32         # number_of_per_atom_features (base embedding dim)
MAX_PERIOD = 6      # maximum_period
F_PERIOD = 8        # number_of_per_period_features
MAX_GROUP = 19      # maximum_group
F_GROUP = 8         # number_of_per_group_features
D_IN = F_ATOM + F_PERIOD + F_GROUP + 1 + 1   # 50 (mixing input dim)
D_OUT = F_ATOM                               # 32 (mixing output dim)

PACK = 128 // D_OUT          # 4 atoms packed per 128-lane output row
NL_OH = PACK * MAX_Z         # 80 one-hot lanes (4 block-diagonal slots of 20)
NT = 4 * PACK                # 16 tail lanes: [chg x4 | spin x4 | ones x4 | 0 x4]
Z_SENTINEL = NL_OH           # sentinel offset: never matches any one-hot lane

TM4_MAX = 2048               # max packed rows / block  (= 8192 atoms / block)
TARGET_BLOCKS = 4            # prefer >= 4 grid blocks (v7x dual-TC sharding;
                             # harmless on single-TC v5e / v6e)

# small deterministic period / group lookup tables (atomic numbers 1..20)
# (stand-ins for modelforge.potential.utils.atomic_period_dict / atomic_group_dict)
_PERIOD_OF_Z = np.zeros(MAX_Z + 1, dtype=np.int32)
_GROUP_OF_Z = np.zeros(MAX_Z + 1, dtype=np.int32)
_period_map = {1: 1, 2: 1, **{z: 2 for z in range(3, 11)},
               **{z: 3 for z in range(11, 19)}, 19: 4, 20: 4}
_group_map = {1: 1, 2: 18, 3: 1, 4: 2, 5: 13, 6: 14, 7: 15, 8: 16, 9: 17,
              10: 18, 11: 1, 12: 2, 13: 13, 14: 14, 15: 15, 16: 16, 17: 17,
              18: 18, 19: 1, 20: 2}
for z in range(1, MAX_Z + 1):
    _PERIOD_OF_Z[z] = _period_map[z]
    _GROUP_OF_Z[z] = _group_map[z]


# ----------------------------- kernel ------------------------------------ #
def featurize_kernel(zoff_ref, tail_ref, toh_ref, ttail_ref, out_ref):
    """Per block: build the packed (4-atom) one-hot with one compare per pack
    slot, then two small matmuls:
        out = onehot(80) @ T_oh(80,128)  +  tail(16) @ T_tail(16,128)
    T_tail carries the charge / spin mixing rows and the bias (via ones lanes),
    so there is no post-matmul bias add and no where-merged lanes."""
    tm4 = zoff_ref.shape[0]
    lane = jax.lax.broadcasted_iota(jnp.int32, (tm4, NL_OH), 1)   # 0..79
    zoff = zoff_ref[...]                       # (tm4, 4) int32, pre-offset per slot

    m = lane == zoff[:, 0:1]                   # single compare per pack slot
    for k in range(1, PACK):                   # unrolled (PACK == 4)
        m = m | (lane == zoff[:, k:k + 1])
    onehot = m.astype(jnp.float32)             # (tm4, 80)

    out_ref[...] = (
        jnp.dot(onehot, toh_ref[...], preferred_element_type=jnp.float32)
        + jnp.dot(tail_ref[...], ttail_ref[...], preferred_element_type=jnp.float32))


# -------------------- parameter folding (prep, runs once) ----------------- #
def build_fused_tables(emb_z, emb_p, emb_g, w_mix, b_mix):
    """Fold the three embedding tables through W_mix (in float64) into one
    per-Z table, laid out block-diagonally so 4 atoms share a 128-lane output
    row, plus a small [16,128] tail table carrying per-slot charge / spin
    mixing rows and the bias (consumed via always-1 lanes)."""
    ez = np.asarray(emb_z, np.float64)
    ep = np.asarray(emb_p, np.float64)
    eg = np.asarray(emb_g, np.float64)
    w = np.asarray(w_mix, np.float64)
    b = np.asarray(b_mix, np.float64).reshape(D_OUT)

    wz = w[:F_ATOM]
    wp = w[F_ATOM:F_ATOM + F_PERIOD]
    wg = w[F_ATOM + F_PERIOD:F_ATOM + F_PERIOD + F_GROUP]
    w_chg = w[F_ATOM + F_PERIOD + F_GROUP]
    w_spin = w[F_ATOM + F_PERIOD + F_GROUP + 1]

    zs = np.arange(MAX_Z)
    # T[z] = emb_z[z] @ Wz + emb_p[period(z)] @ Wp + emb_g[group(z)] @ Wg
    t_z = ez @ wz + ep[_PERIOD_OF_Z[zs]] @ wp + eg[_GROUP_OF_Z[zs]] @ wg  # [20,32]

    t_oh = np.zeros((NL_OH, PACK * D_OUT), np.float64)
    t_tail = np.zeros((NT, PACK * D_OUT), np.float64)
    for k in range(PACK):
        cols = slice(k * D_OUT, (k + 1) * D_OUT)
        t_oh[k * MAX_Z:(k + 1) * MAX_Z, cols] = t_z     # one-hot lanes, slot k
        t_tail[k, cols] = w_chg                          # charge lane, slot k
        t_tail[PACK + k, cols] = w_spin                  # spin lane,   slot k
        t_tail[2 * PACK + k, cols] = b                   # bias via ones lane
        # rows 3*PACK .. 4*PACK-1 stay zero (K padded to a multiple of 8)
    return jnp.asarray(t_oh, jnp.float32), jnp.asarray(t_tail, jnp.float32)


# ------------------------------ wrapper ----------------------------------- #
def featurize_input(atomic_numbers, atomic_subsystem_indices,
                    per_system_total_charge, per_system_spin_state,
                    t_oh, t_tail):
    """FeaturizeInput.forward.  Per-atom HBM input is ~20 B/atom (packed
    pre-offset Z column + charge/spin/ones tail); all compute is one Pallas
    call with two tiny matmuls per block."""
    def cdiv(a, b):
        return -(-a // b)

    def rup(a, b):
        return cdiv(a, b) * b

    n = atomic_numbers.shape[0]
    n4 = cdiv(n, PACK)
    # Prefer >= TARGET_BLOCKS blocks (v7x dual-TC), cap block size at TM4_MAX.
    tm4 = min(TM4_MAX, max(8, rup(cdiv(n4, TARGET_BLOCKS), 8)))
    n4_pad = rup(n4, tm4)
    n_pad = n4_pad * PACK

    # AddPerMoleculeValue: unique(counts) + repeat_interleave is equivalent to a
    # gather by atomic_subsystem_indices ONLY if indices are dense, 0-based,
    # sorted per-system ids matching the per-system array order (true for
    # modelforge NNPInput batches).
    chg = per_system_total_charge[atomic_subsystem_indices].astype(jnp.float32)
    spin = per_system_spin_state[atomic_subsystem_indices].astype(jnp.float32)

    # TODO(synk): Z >= maximum_atomic_number would raise in torch.nn.Embedding;
    # here (and for padded atoms) it is remapped to a sentinel that contributes
    # a zero embedding and cannot alias another pack slot's lanes.
    z = atomic_numbers.astype(jnp.int32)
    z_safe = jnp.where((z >= 0) & (z < MAX_Z), z, Z_SENTINEL)

    def pack(a, fill):
        a = jnp.pad(a, (0, n_pad - n), constant_values=fill)
        return a.reshape(n4_pad, PACK)

    # Pre-offset Z per pack slot: zoff[:, k] = z + k*MAX_Z  (int32, 16 B/row)
    zoff4 = pack(z_safe, Z_SENTINEL) + \
        (jnp.arange(PACK, dtype=jnp.int32) * MAX_Z)[None, :]
    # Tail slab: [chg x4 | spin x4 | ones x4 (bias) | zeros x4 (K pad)]
    tail = jnp.concatenate(
        [pack(chg, 0.0), pack(spin, 0.0),
         jnp.ones((n4_pad, PACK), jnp.float32),
         jnp.zeros((n4_pad, PACK), jnp.float32)], axis=1)        # (n4_pad, 16)

    grid = (n4_pad // tm4,)
    out_packed = pl.pallas_call(
        featurize_kernel,
        out_shape=jax.ShapeDtypeStruct((n4_pad, PACK * D_OUT), jnp.float32),
        grid=grid,
        in_specs=[
            pl.BlockSpec((tm4, PACK), lambda i: (i, 0)),             # zoff
            pl.BlockSpec((tm4, NT), lambda i: (i, 0)),               # tail
            pl.BlockSpec((NL_OH, PACK * D_OUT), lambda i: (0, 0)),   # one-hot table
            pl.BlockSpec((NT, PACK * D_OUT), lambda i: (0, 0)),      # tail table
        ],
        out_specs=pl.BlockSpec((tm4, PACK * D_OUT), lambda i: (i, 0)),
        compiler_params=pltpu.CompilerParams(
            dimension_semantics=("parallel",)),
    )(zoff4, tail, t_oh, t_tail)

    # (n4_pad, 128) -> (n_pad, 32) is a free row-major reshape; drop padding.
    return out_packed.reshape(n_pad, D_OUT)[:n]


# ------------------------ pure-JAX reference ------------------------------ #
def featurize_reference(atomic_numbers, atomic_subsystem_indices,
                        per_system_total_charge, per_system_spin_state,
                        emb_z, emb_p, emb_g, w_mix, b_mix):
    periods = jnp.asarray(_PERIOD_OF_Z)[atomic_numbers]
    groups = jnp.asarray(_GROUP_OF_Z)[atomic_numbers]
    e_z = emb_z[atomic_numbers]
    e_p = emb_p[periods]
    e_g = emb_g[groups]
    chg = per_system_total_charge[atomic_subsystem_indices][:, None]
    spin = per_system_spin_state[atomic_subsystem_indices][:, None]
    x = jnp.concatenate([e_z, e_p, e_g, chg, spin], axis=1)
    return jnp.dot(x, w_mix, precision=jax.lax.Precision.HIGHEST) + b_mix


# ------------------------------- main ------------------------------------- #
if __name__ == "__main__":
    key = jax.random.PRNGKey(0)
    k1, k2, k3, k4, k5 = jax.random.split(key, 5)

    # deterministic "checkpoint": embedding tables + mixing linear params
    emb_z = 0.1 * jax.random.normal(k1, (MAX_Z, F_ATOM), dtype=jnp.float32)
    emb_p = 0.1 * jax.random.normal(k2, (MAX_PERIOD, F_PERIOD), dtype=jnp.float32)
    emb_g = 0.1 * jax.random.normal(k3, (MAX_GROUP, F_GROUP), dtype=jnp.float32)
    # DenseWithCustomDist(D_IN -> D_OUT): stored already transposed, [D_IN, D_OUT]
    w_mix = 0.1 * jax.random.normal(k4, (D_IN, D_OUT), dtype=jnp.float32)
    b_mix = 0.01 * jax.random.normal(k5, (1, D_OUT), dtype=jnp.float32)

    t_oh, t_tail = build_fused_tables(emb_z, emb_p, emb_g, w_mix, b_mix)

    # small NNPInput: 2 molecules, 10 atoms (non-multiple-of-4 to test padding)
    atomic_numbers = jnp.array([1, 6, 8, 1, 7, 6, 1, 17, 8, 16], dtype=jnp.int32)
    atomic_subsystem_indices = jnp.array([0, 0, 0, 0, 1, 1, 1, 1, 1, 1],
                                         dtype=jnp.int32)
    per_system_total_charge = jnp.array([0.0, -1.0], dtype=jnp.float32)
    per_system_spin_state = jnp.array([1.0, 2.0], dtype=jnp.float32)

    out = featurize_input(atomic_numbers, atomic_subsystem_indices,
                          per_system_total_charge, per_system_spin_state,
                          t_oh, t_tail)
    out = jax.block_until_ready(out)

    ref = featurize_reference(atomic_numbers, atomic_subsystem_indices,
                              per_system_total_charge, per_system_spin_state,
                              emb_z, emb_p, emb_g, w_mix, b_mix)
    np.testing.assert_allclose(np.asarray(out), np.asarray(ref),
                               rtol=1e-5, atol=1e-5)
    assert out.shape == (atomic_numbers.shape[0], F_ATOM)
    print("KERNEL_OK")
</pallas_src>

<mosaic_0001>
module attributes {stable_mosaic.version = 11 : i64} {
  func.func @featurize_kernel(%arg0: i32, %arg1: memref<8x4xi32, #tpu.memory_space<vmem>>, %arg2: memref<8x16xf32, #tpu.memory_space<vmem>>, %arg3: memref<80x128xf32, #tpu.memory_space<vmem>>, %arg4: memref<16x128xf32, #tpu.memory_space<vmem>>, %arg5: memref<8x128xf32, #tpu.memory_space<vmem>>) attributes {dimension_semantics = [#tpu.dimension_semantics<parallel>], iteration_bounds = array<i64: 1>, scalar_prefetch = 0 : i64, scratch_operands = 0 : i64, tpu.core_type = #tpu.core_type<tc>, window_params = [{transform_indices = @transform_0, window_bounds = array<i64: 8, 4>}, {transform_indices = @transform_1, window_bounds = array<i64: 8, 16>}, {pipeline_mode = #tpu.pipeline_mode<synchronous>, transform_indices = @transform_2, window_bounds = array<i64: 80, 128>}, {pipeline_mode = #tpu.pipeline_mode<synchronous>, transform_indices = @transform_3, window_bounds = array<i64: 16, 128>}, {transform_indices = @transform_4, window_bounds = array<i64: 8, 128>}]} {
    %0 = tpu.iota {dimensions = array<i32: 1>} : vector<8x80xi32>
    %c0 = arith.constant 0 : index
    %c0_0 = arith.constant 0 : index
    %1 = vector.load %arg1[%c0, %c0_0] : memref<8x4xi32, #tpu.memory_space<vmem>>, vector<8x4xi32>
    %2 = vector.extract_strided_slice %1 {offsets = [0, 0], sizes = [8, 1], strides = [1, 1]} : vector<8x4xi32> to vector<8x1xi32>
    %3 = vector.broadcast %2 : vector<8x1xi32> to vector<8x80xi32>
    %4 = arith.cmpi eq, %0, %3 : vector<8x80xi32>
    %5 = vector.extract_strided_slice %1 {offsets = [0, 1], sizes = [8, 1], strides = [1, 1]} : vector<8x4xi32> to vector<8x1xi32>
    %6 = vector.broadcast %5 : vector<8x1xi32> to vector<8x80xi32>
    %7 = arith.cmpi eq, %0, %6 : vector<8x80xi32>
    %8 = arith.ori %4, %7 : vector<8x80xi1>
    %9 = vector.extract_strided_slice %1 {offsets = [0, 2], sizes = [8, 1], strides = [1, 1]} : vector<8x4xi32> to vector<8x1xi32>
    %10 = vector.broadcast %9 : vector<8x1xi32> to vector<8x80xi32>
    %11 = arith.cmpi eq, %0, %10 : vector<8x80xi32>
    %12 = arith.ori %8, %11 : vector<8x80xi1>
    %13 = vector.extract_strided_slice %1 {offsets = [0, 3], sizes = [8, 1], strides = [1, 1]} : vector<8x4xi32> to vector<8x1xi32>
    %14 = vector.broadcast %13 : vector<8x1xi32> to vector<8x80xi32>
    %15 = arith.cmpi eq, %0, %14 : vector<8x80xi32>
    %16 = arith.ori %12, %15 : vector<8x80xi1>
    %17 = arith.extui %16 : vector<8x80xi1> to vector<8x80xi32>
    %18 = arith.sitofp %17 : vector<8x80xi32> to vector<8x80xf32>
    %c0_1 = arith.constant 0 : index
    %c0_2 = arith.constant 0 : index
    %19 = vector.load %arg3[%c0_1, %c0_2] : memref<80x128xf32, #tpu.memory_space<vmem>>, vector<80x128xf32>
    %cst = arith.constant dense<0.000000e+00> : vector<8x128xf32>
    %20 = tpu.matmul %18, %19, %cst {dimension_numbers = #tpu.dot_dimension_numbers<[1], [0], [0], [1], [0, 0, 1, 1], [], []>} : vector<8x80xf32>, vector<80x128xf32>, vector<8x128xf32> -> vector<8x128xf32>
    %c0_3 = arith.constant 0 : index
    %c0_4 = arith.constant 0 : index
    %21 = vector.load %arg2[%c0_3, %c0_4] : memref<8x16xf32, #tpu.memory_space<vmem>>, vector<8x16xf32>
    %c0_5 = arith.constant 0 : index
    %c0_6 = arith.constant 0 : index
    %22 = vector.load %arg4[%c0_5, %c0_6] : memref<16x128xf32, #tpu.memory_space<vmem>>, vector<16x128xf32>
    %cst_7 = arith.constant dense<0.000000e+00> : vector<8x128xf32>
    %23 = tpu.matmul %21, %22, %cst_7 {dimension_numbers = #tpu.dot_dimension_numbers<[1], [0], [0], [1], [0, 0, 1, 1], [], []>} : vector<8x16xf32>, vector<16x128xf32>, vector<8x128xf32> -> vector<8x128xf32>
    %24 = arith.addf %20, %23 : vector<8x128xf32>
    %c0_8 = arith.constant 0 : index
    %c0_9 = arith.constant 0 : index
    %25 = vector.load %arg5[%c0_8, %c0_9] : memref<8x128xf32, #tpu.memory_space<vmem>>, vector<8x128xf32>
    tpu.vector_store %arg5[%c0_8, %c0_9], %24 {strides = array<i32>} : memref<8x128xf32, #tpu.memory_space<vmem>>, vector<8x128xf32>,
    return
  }
  func.func @transform_0(%arg0: i32) -> (i32, i32) {
    %c0_i32 = arith.constant 0 : i32
    %c0_i32_0 = arith.constant 0 : i32
    return %arg0, %c0_i32 : i32, i32
  }
  func.func @transform_1(%arg0: i32) -> (i32, i32) {
    %c0_i32 = arith.constant 0 : i32
    %c0_i32_0 = arith.constant 0 : i32
    return %arg0, %c0_i32 : i32, i32
  }
  func.func @transform_2(%arg0: i32) -> (i32, i32) {
    %c0_i32 = arith.constant 0 : i32
    %c0_i32_0 = arith.constant 0 : i32
    %c0_i32_1 = arith.constant 0 : i32
    return %c0_i32, %c0_i32_0 : i32, i32
  }
  func.func @transform_3(%arg0: i32) -> (i32, i32) {
    %c0_i32 = arith.constant 0 : i32
    %c0_i32_0 = arith.constant 0 : i32
    %c0_i32_1 = arith.constant 0 : i32
    return %c0_i32, %c0_i32_0 : i32, i32
  }
  func.func @transform_4(%arg0: i32) -> (i32, i32) {
    %c0_i32 = arith.constant 0 : i32
    %c0_i32_0 = arith.constant 0 : i32
    return %arg0, %c0_i32 : i32, i32
  }
}

</mosaic_0001>

<llo_original>
// kernel: tpu_custom_call.1
$region0: #{tpu_custom_call.1}
  #allocation0 [shape = 'u32[]', space=smem, size = 0x4, offset = 0x4, fixed_abs, tag = 'smem constant byte address 0x4 - core index']
  #allocation1 [shape = 'u32[144,128]{1,0:T(1,128)}', space=vmem, size = 0x12000, scoped, tag = 'internal scratch']
  %s0 = inlined_call_operand.vmem [shape: s32[8,4], index: 0, kind: input, shape index: {}]
  %s1 = inlined_call_operand.hbm [shape: f32[8,16], index: 1, kind: input, shape index: {}]
  %s2 = inlined_call_operand.hbm [shape: f32[80,128], index: 2, kind: input, shape index: {}]
  %s3 = inlined_call_operand.vmem [shape: f32[16,128], index: 3, kind: input, shape index: {}]
  %s4 = inlined_call_operand.hbm [shape: f32[8,128], index: 4, kind: output, shape index: {}]
  %s5 = sld [smem:[#allocation0]]
  $region34: #{tpu_custom_call.1} parent=0
    _
  %s7 = ssub.s32 1, %s5
  %s8 = scalar_select 0, %s7, %s5
  $region1: #{tpu_custom_call.1} parent=0
    #allocation2 [shape = 'u8[4096]{0}', space=vmem, size = 0x1000, scoped, tag = 'input window, operand 1, single buffered']
    #allocation3 [shape = 's32[1]{0}', space=sflag, size = 0x4, scoped, tag = 'scoped memory for tpu_custom_call.1']
    #allocation4 [shape = 's32[1]{0}', space=sflag, size = 0x4, scoped, tag = 'scoped memory for tpu_custom_call.1']
    #allocation5 [shape = 'u8[40960]{0}', space=vmem, size = 0xa000, scoped, tag = 'input window, operand 2, single buffered']
    #allocation6 [shape = 's32[1]{0}', space=sflag, size = 0x4, scoped, tag = 'scoped memory for tpu_custom_call.1']
    #allocation7 [shape = 'u8[4096]{0}', space=vmem, size = 0x1000, scoped, tag = 'output window, operand 0, single buffered']
    %9 = vsyncpa [#allocation3], 0
    %10 = vsyncpa [#allocation6], 0
    %11 = vsyncpa [#allocation4], 0
    // Predicated region
    $region2: #{tpu_custom_call.1} parent=1 // pred_check
      _
    $region3: #{tpu_custom_call.1} parent=1 // pred_check_branch
      %13 = sbr.rel (0) target = $region5
    $region4: #{tpu_custom_call.1} parent=1 // pred_region
      _
    $region5: #{tpu_custom_call.1} parent=1 // pred_fallthru
      _
    // Predicated region
    $region6: #{tpu_custom_call.1} parent=1 // pred_check
      _
    $region7: #{tpu_custom_call.1} parent=1 // pred_check_branch
      %15 = sbr.rel (0) target = $region9
    $region8: #{tpu_custom_call.1} parent=1 // pred_region
      %s17 = ssub.s32 128, 128
      %18 = vsyncadd [#allocation3], %s17
      %s20 = sshll.u32 [#allocation2], 4
      %s21 = int_to_ptr.vmem [resolvable:$true] %s20
      %23 = dma.hbm_to_vmem [thread:$0]  %s1, 128, %s21, [#allocation3]
    $region9: #{tpu_custom_call.1} parent=1 // pred_fallthru
      _
    // Predicated region
    $region10: #{tpu_custom_call.1} parent=1 // pred_check
      _
    $region11: #{tpu_custom_call.1} parent=1 // pred_check_branch
      %25 = sbr.rel (0) target = $region13
    $region12: #{tpu_custom_call.1} parent=1 // pred_region
      %s27 = ssub.s32 1280, 1280
      %28 = vsyncadd [#allocation6], %s27
      %s29 = sshll.u32 [#allocation5], 4
      %s30 = int_to_ptr.vmem [resolvable:$true] %s29
      %35 = dma.hbm_to_vmem [thread:$0]  %s2, 1280, %s30, [#allocation6], 128, 128, 8
    $region13: #{tpu_custom_call.1} parent=1 // pred_fallthru
      _
    // Predicated region
    $region14: #{tpu_custom_call.1} parent=1 // pred_check
      _
    $region15: #{tpu_custom_call.1} parent=1 // pred_check_branch
      %37 = sbr.rel (0) target = $region17
    $region16: #{tpu_custom_call.1} parent=1 // pred_region
      _
    $region17: #{tpu_custom_call.1} parent=1 // pred_fallthru
      _
    // Predicated region
    $region18: #{tpu_custom_call.1} parent=1 // pred_check
      _
    $region19: #{tpu_custom_call.1} parent=1 // pred_check_branch
      %39 = sbr.rel (0) target = $region21
    $region20: #{tpu_custom_call.1} parent=1 // pred_region
      %40 = dma.done [#allocation3], 128
    $region21: #{tpu_custom_call.1} parent=1 // pred_fallthru
      _
    // Predicated region
    $region22: #{tpu_custom_call.1} parent=1 // pred_check
      _
    $region23: #{tpu_custom_call.1} parent=1 // pred_check_branch
      %42 = sbr.rel (0) target = $region25
    $region24: #{tpu_custom_call.1} parent=1 // pred_region
      %43 = dma.done [#allocation6], 1280
    $region25: #{tpu_custom_call.1} parent=1 // pred_fallthru
      _
    %v44 = vlaneseq
    %v45 = vand.u32 %v44, 127
    %v46 = vld [vmem:[%s0] sm:$0xff]
    %47 = vset.pattern.permute.xlu0 0
    %48 = vperm.xlu0 %47, %v46
    %v49 = vpop.permute.xlu0 %48
    %vm50 = vcmp.eq.s32.totalorder %v45, %v49
    %51 = vset.pattern.permute.xlu0 1
    %52 = vperm.xlu0 %51, %v46
    %v53 = vpop.permute.xlu0 %52
    %vm54 = vcmp.eq.s32.totalorder %v45, %v53
    %vm55 = vmor %vm50, %vm54
    %56 = vset.pattern.permute.xlu0 2
    %57 = vperm.xlu0 %56, %v46
    %v58 = vpop.permute.xlu0 %57
    %vm59 = vcmp.eq.s32.totalorder %v45, %v58
    %vm60 = vmor %vm55, %vm59
    %61 = vset.pattern.permute.xlu0 3
    %62 = vperm.xlu0 %61, %v46
    %v63 = vpop.permute.xlu0 %62
    %vm64 = vcmp.eq.s32.totalorder %v45, %v63
    %vm65 = vmor %vm60, %vm64
    %v66 = vsel %vm65, 1, 0
    %v67 = vcvt.s32.f32 %v66
    %v68 = vld [vmem:[#allocation5] sm:$0xff]
    %v69 = vld [vmem:[#allocation5 + $0x8] sm:$0xff]
    %v70 = vld [vmem:[#allocation5 + $0x10] sm:$0xff]
    %v71 = vld [vmem:[#allocation5 + $0x18] sm:$0xff]
    %v72 = vld [vmem:[#allocation5 + $0x20] sm:$0xff]
    %v73 = vld [vmem:[#allocation5 + $0x28] sm:$0xff]
    %v74 = vld [vmem:[#allocation5 + $0x30] sm:$0xff]
    %v75 = vld [vmem:[#allocation5 + $0x38] sm:$0xff]
    %v76 = vld [vmem:[#allocation5 + $0x40] sm:$0xff]
    %v77 = vld [vmem:[#allocation5 + $0x48] sm:$0xff]
    %v78 = vld [vmem:[#allocation2] sm:$0xff]
    %v79 = vld [vmem:[%s3] sm:$0xff]
    %v80 = vld [vmem:[%s3 + $0x8] sm:$0xff]
    %vm81 = vcmask 130048
    %v83 = vsel %vm81, %v78, 0
    %85 = vmatprep.subr.mxu0 0.0
    %86 = vmatpush1.msra.mxu0 0.0
    %87 = vmatprep.subr.mxu0 0.0
    %88 = vmatpush1.msra.mxu0 0.0
    %89 = vmatprep.subr.mxu0 0.0
    %90 = vmatpush1.msra.mxu0 0.0
    %91 = vmatprep.subr.mxu0 0.0
    %92 = vmatpush1.msra.mxu0 0.0
    %93 = vmatprep.subr.mxu0 0.0
    %94 = vmatpush1.msra.mxu0 0.0
    %95 = vmatprep.subr.mxu0 0.0
    %96 = vmatpush1.msra.mxu0 0.0
    %97 = vmatprep.subr.mxu0 0.0
    %98 = vmatpush1.msra.mxu0 0.0
    %99 = vmatprep.subr.mxu0 0.0
    %100 = vmatpush1.msra.mxu0 0.0
    %101 = vmatprep.subr.mxu0 0.0
    %102 = vmatpush1.msra.mxu0 0.0
    %103 = vmatprep.subr.mxu0 0.0
    %104 = vmatpush1.msra.mxu0 0.0
    %105 = vmatprep.subr.mxu0 0.0
    %106 = vmatpush1.msra.mxu0 0.0
    %107 = vmatprep.subr.mxu0 0.0
    %108 = vmatpush1.msra.mxu0 0.0
    %109 = vmatprep.subr.mxu0 0.0
    %110 = vmatpush1.msra.mxu0 0.0
    %111 = vmatprep.subr.mxu0 0.0
    %112 = vmatpush1.msra.mxu0 0.0
    %113 = vmatprep.subr.mxu0 0.0
    %114 = vmatpush1.msra.mxu0 %v80
    %115 = vmatprep.subr.mxu0 0.0
    %116 = vmatpush1.msra.mxu0 %v79
    %117 = vmatprep.subr.mxu0 0.0
    %118 = vmatpush2.msra.mxu0 0.0
    %119 = vmatprep.subr.mxu0 0.0
    %120 = vmatpush2.msra.mxu0 0.0
    %121 = vmatprep.subr.mxu0 0.0
    %122 = vmatpush2.msra.mxu0 0.0
    %123 = vmatprep.subr.mxu0 0.0
    %124 = vmatpush2.msra.mxu0 0.0
    %125 = vmatprep.subr.mxu0 0.0
    %126 = vmatpush2.msra.mxu0 0.0
    %127 = vmatprep.subr.mxu0 0.0
    %128 = vmatpush2.msra.mxu0 0.0
    %129 = vmatprep.subr.mxu0 0.0
    %130 = vmatpush2.msra.mxu0 0.0
    %131 = vmatprep.subr.mxu0 0.0
    %132 = vmatpush2.msra.mxu0 0.0
    %133 = vmatprep.subr.mxu0 0.0
    %134 = vmatpush2.msra.mxu0 0.0
    %135 = vmatprep.subr.mxu0 0.0
    %136 = vmatpush2.msra.mxu0 0.0
    %137 = vmatprep.subr.mxu0 0.0
    %138 = vmatpush2.msra.mxu0 0.0
    %139 = vmatprep.subr.mxu0 0.0
    %140 = vmatpush2.msra.mxu0 0.0
    %141 = vmatprep.subr.mxu0 0.0
    %142 = vmatpush2.msra.mxu0 0.0
    %143 = vmatprep.subr.mxu0 0.0
    %144 = vmatpush2.msra.mxu0 0.0
    %145 = vmatprep.subr.mxu0 0.0
    %146 = vmatpush2.msra.mxu0 0.0
    %147 = vmatprep.subr.mxu0 0.0
    %148 = vmatpush2.msra.mxu0 0.0
    %149 = vmatprep.mubr.f32.mxu0 0.0
    %150 = vmatmul.mubr.f32.gmra.mxu0 %v83
    %v151 = vpop.f32.mrf.mxu0
    %v152 = vadd.f32 0.0, %v151
    %v153 = vpop.f32.mrf.mxu0
    %154 = vdwg.mxu0
    %vm155 = vcmask 654336
    %v157 = vsel %vm155, %v67, 0
    %159 = vmatprep.subr.mxu0 0.0
    %160 = vmatpush1.msra.mxu0 0.0
    %161 = vmatprep.subr.mxu0 0.0
    %162 = vmatpush1.msra.mxu0 0.0
    %163 = vmatprep.subr.mxu0 0.0
    %164 = vmatpush1.msra.mxu0 0.0
    %165 = vmatprep.subr.mxu0 0.0
    %166 = vmatpush1.msra.mxu0 0.0
    %167 = vmatprep.subr.mxu0 0.0
    %168 = vmatpush1.msra.mxu0 0.0
    %169 = vmatprep.subr.mxu0 0.0
    %170 = vmatpush1.msra.mxu0 0.0
    %171 = vmatprep.subr.mxu0 0.0
    %172 = vmatpush1.msra.mxu0 %v77
    %173 = vmatprep.subr.mxu0 0.0
    %174 = vmatpush1.msra.mxu0 %v76
    %175 = vmatprep.subr.mxu0 0.0
    %176 = vmatpush1.msra.mxu0 %v75
    %177 = vmatprep.subr.mxu0 0.0
    %178 = vmatpush1.msra.mxu0 %v74
    %179 = vmatprep.subr.mxu0 0.0
    %180 = vmatpush1.msra.mxu0 %v73
    %181 = vmatprep.subr.mxu0 0.0
    %182 = vmatpush1.msra.mxu0 %v72
    %183 = vmatprep.subr.mxu0 0.0
    %184 = vmatpush1.msra.mxu0 %v71
    %185 = vmatprep.subr.mxu0 0.0
    %186 = vmatpush1.msra.mxu0 %v70
    %187 = vmatprep.subr.mxu0 0.0
    %188 = vmatpush1.msra.mxu0 %v69
    %189 = vmatprep.subr.mxu0 0.0
    %190 = vmatpush1.msra.mxu0 %v68
    %191 = vmatprep.subr.mxu0 0.0
    %192 = vmatpush2.msra.mxu0 0.0
    %193 = vmatprep.subr.mxu0 0.0
    %194 = vmatpush2.msra.mxu0 0.0
    %195 = vmatprep.subr.mxu0 0.0
    %196 = vmatpush2.msra.mxu0 0.0
    %197 = vmatprep.subr.mxu0 0.0
    %198 = vmatpush2.msra.mxu0 0.0
    %199 = vmatprep.subr.mxu0 0.0
    %200 = vmatpush2.msra.mxu0 0.0
    %201 = vmatprep.subr.mxu0 0.0
    %202 = vmatpush2.msra.mxu0 0.0
    %203 = vmatprep.subr.mxu0 0.0
    %204 = vmatpush2.msra.mxu0 0.0
    %205 = vmatprep.subr.mxu0 0.0
    %206 = vmatpush2.msra.mxu0 0.0
    %207 = vmatprep.subr.mxu0 0.0
    %208 = vmatpush2.msra.mxu0 0.0
    %209 = vmatprep.subr.mxu0 0.0
    %210 = vmatpush2.msra.mxu0 0.0
    %211 = vmatprep.subr.mxu0 0.0
    %212 = vmatpush2.msra.mxu0 0.0
    %213 = vmatprep.subr.mxu0 0.0
    %214 = vmatpush2.msra.mxu0 0.0
    %215 = vmatprep.subr.mxu0 0.0
    %216 = vmatpush2.msra.mxu0 0.0
    %217 = vmatprep.subr.mxu0 0.0
    %218 = vmatpush2.msra.mxu0 0.0
    %219 = vmatprep.subr.mxu0 0.0
    %220 = vmatpush2.msra.mxu0 0.0
    %221 = vmatprep.subr.mxu0 0.0
    %222 = vmatpush2.msra.mxu0 0.0
    %223 = vmatprep.mubr.f32.mxu0 0.0
    %224 = vmatmul.mubr.f32.gmra.mxu0 %v157
    %v225 = vpop.f32.mrf.mxu0
    %v226 = vadd.f32 %v152, %v225
    %v227 = vpop.f32.mrf.mxu0
    %228 = vdwg.mxu0
    %229 = vst [vmem:[#allocation7] sm:$0xff] %v226
    // Predicated region
    $region26: #{tpu_custom_call.1} parent=1 // pred_check
      _
    $region27: #{tpu_custom_call.1} parent=1 // pred_check_branch
      %231 = sbr.rel (0) target = $region29
    $region28: #{tpu_custom_call.1} parent=1 // pred_region
      %s233 = ssub.s32 128, 128
      %234 = vsyncadd [#allocation4], %s233
      %s236 = sshll.u32 [#allocation7], 4
      %s237 = int_to_ptr.vmem [resolvable:$true] %s236
      %239 = dma.vmem_to_hbm [thread:$0]  %s237, 128, %s4, [#allocation4]
    $region29: #{tpu_custom_call.1} parent=1 // pred_fallthru
      _
    // Predicated region
    $region30: #{tpu_custom_call.1} parent=1 // pred_check
      _
    $region31: #{tpu_custom_call.1} parent=1 // pred_check_branch
      %241 = sbr.rel (0) target = $region33
    $region32: #{tpu_custom_call.1} parent=1 // pred_region
      %242 = dma.done [#allocation4], 128
    $region33: #{tpu_custom_call.1} parent=1 // pred_fallthru
      _
    %243 = vsyncpa [#allocation3], 1
    %244 = vsyncpa [#allocation6], 1
    %245 = vsyncpa [#allocation4], 1

</llo_original>
